<compile_context>
chip_gen: v7x
topology: tpu7x:2x2x1
jax: 0.10.0
libtpu: 0.0.40
codegen_flags: <defaults>
</compile_context>

<pallas_src>
import functools
import math

import jax
import jax.numpy as jnp
from jax import lax
from jax.experimental import pallas as pl
from jax.experimental.pallas import tpu as pltpu


def _round_up(x, n):
    return ((x + n - 1) // n) * n


def _largest_divisor_at_most(n, cap):
    cap = max(1, min(n, cap))
    for k in range(cap, 0, -1):
        if n % k == 0:
            return k
    return 1


def _pick_batch_tile(b8):
    """Largest multiple-of-8 tile (<=256) dividing b8, preferring >=2 tiles so the
    'parallel' batch grid axis can be sharded across v7x's two TensorCores."""
    divs = [t for t in range(8, min(256, b8) + 1, 8) if b8 % t == 0]
    if not divs:
        return b8
    two_tile = [t for t in divs if b8 // t >= 2]
    return max(two_tile) if two_tile else max(divs)


def _mala_kernel(x_ref, g_ref, c_ref, ec_ref, eta_ref, logr_ref,
                 zs_ref, ediff_ref,
                 x_sc, grad_sc, ecur_sc, e0_sc, *,
                 stepsize, scale, inv_scale, lang_steps, k_chunk):
    m = pl.program_id(1)                 # metropolis-chunk axis ("arbitrary", carried)
    G = g_ref[...]                       # (D, D)  fused quadratic-form matrix
    c = c_ref[...]                       # (Bt, D) fused linear term (lambd * ys @ W)
    e_const = ec_ref[...]                # (Bt, 1) lambd * 0.5 * ||ys||^2

    def grad_of(z):
        # grad E(z) = z @ G - c : ONE MXU matmul per energy/grad evaluation.
        return jnp.dot(z, G, preferred_element_type=jnp.float32) - c

    def energy_of(z, grad):
        # E(z) = 0.5*z G z^T - z.c + e_const == 0.5*sum(z*(grad - c)) + e_const
        # (single cross-lane reduction instead of two).
        return 0.5 * jnp.sum(z * (grad - c), axis=1, keepdims=True) + e_const

    # ---- init carried state at the first metropolis chunk ---------------------
    @pl.when(m == 0)
    def _():
        x0 = x_ref[...]
        g0 = grad_of(x0)
        e0 = energy_of(x0, g0)
        x_sc[...] = x0
        grad_sc[...] = g0
        ecur_sc[...] = e0
        e0_sc[...] = e0

    # ---- K metropolis steps per grid iteration (carry kept functionally) ------
    def metropolis_step(k, carry):
        x_curr, grad_curr, e_curr = carry

        # Langevin proposal: the first L-1 steps need only the gradient.
        def lang_body(i, lc):
            xl, grad_l, logdet = lc
            eta = eta_ref[k, i]
            y = xl - stepsize * grad_l + scale * eta
            grad_y = grad_of(y)
            eta_back = (xl - y + stepsize * grad_y) * inv_scale
            logdet = logdet + 0.5 * jnp.sum(eta * eta - eta_back * eta_back,
                                            axis=1, keepdims=True)
            return y, grad_y, logdet

        xl, grad_l, logdet = lax.fori_loop(
            0, lang_steps - 1, lang_body,
            (x_curr, grad_curr, jnp.zeros_like(e_curr)), unroll=True)

        # Final langevin step: the proposal energy is only needed here.
        eta = eta_ref[k, lang_steps - 1]
        y = xl - stepsize * grad_l + scale * eta
        grad_prop = grad_of(y)
        e_prop = energy_of(y, grad_prop)
        eta_back = (xl - y + stepsize * grad_prop) * inv_scale
        logdet = logdet + 0.5 * jnp.sum(eta * eta - eta_back * eta_back,
                                        axis=1, keepdims=True)

        # Metropolis accept/reject in the log domain (no in-kernel exp; identical
        # decisions to r < exp(delta) outside exp over/underflow corner cases).
        take = logr_ref[k] < (e_curr - e_prop + logdet)          # (Bt, 1) bool
        x_new = jnp.where(take, y, x_curr)
        g_new = jnp.where(take, grad_prop, grad_curr)
        e_new = jnp.where(take, e_prop, e_curr)
        return x_new, g_new, e_new

    x_new, g_new, e_new = lax.fori_loop(
        0, k_chunk, metropolis_step,
        (x_sc[...], grad_sc[...], ecur_sc[...]))

    x_sc[...] = x_new
    grad_sc[...] = g_new
    ecur_sc[...] = e_new

    # ---- finalize (matches the torch quirk: e = rej*e_curr + acc*e_prop of the
    #      last metropolis step, which is exactly the carried e_new) -------------
    @pl.when(m == pl.num_programs(1) - 1)
    def _():
        zs_ref[...] = x_new
        ediff_ref[...] = e_new - e0_sc[...]


def mala_layer_forward(xs, ys, W, eta, r_unif, *,
                       lambd, stepsize, metr_steps_per_block, lang_steps,
                       damp_beta=1.0, k_chunk=None):
    B, D = xs.shape
    M = int(metr_steps_per_block)
    L = int(lang_steps)
    assert L >= 1, "lang_steps must be >= 1 (torch code is undefined for 0)"
    assert eta.shape == (M * L, B, D)
    assert r_unif.shape == (M, B, 1)

    lambd = float(lambd)
    stepsize = float(stepsize)
    beta = float(damp_beta)
    scale = math.sqrt(2.0 * stepsize / beta)
    inv_scale = 1.0 / scale

    f32 = jnp.float32
    # Fused quadratic-form parameters (one MXU matmul per energy/grad eval in-kernel).
    G = (lambd * (W.T @ W) + (1.0 - lambd) * jnp.eye(D, dtype=f32)).astype(f32)
    c = (lambd * (ys @ W)).astype(f32)
    e_const = (lambd * 0.5 * jnp.sum(ys * ys, axis=1, keepdims=True)).astype(f32)

    # Batch tiling.  D is intentionally NOT padded to 128 (block last dim == full
    # array dim is legal), so eta HBM traffic / matmul FLOPs are not inflated.
    B8 = _round_up(B, 8)
    Bt = _pick_batch_tile(B8)
    Bp = B8
    n_btiles = Bp // Bt

    # Metropolis chunking: target ~2 MiB of eta per chunk (double-buffered -> 4 MiB,
    # comfortably inside v7x's 64 MiB VMEM), snapped to a divisor of M so no
    # boundary blocks / masking is needed.
    per_step_bytes = L * Bt * D * 4
    k_target = max(1, min(M, (2 << 20) // max(per_step_bytes, 1), 512))
    if k_chunk is None:
        K = _largest_divisor_at_most(M, k_target)
    else:
        K = int(k_chunk)
        assert M % K == 0, "explicit k_chunk must divide metr_steps_per_block"
    Mc = M // K
    # TODO(synk): for awkward (large prime) M, add masked boundary chunks instead of
    # snapping K to a divisor of M.

    # Inputs: eta is only reshaped (free); a batch-pad copy happens only when B is
    # not already a multiple of 8.  Padded rows (x=c=e_const=0, log r=0) stay exactly
    # zero through the dynamics and are sliced away.
    xs_f = xs.astype(f32)
    eta_f = eta.astype(f32).reshape(M, L, B, D)
    logr_f = jnp.log(r_unif.astype(f32))          # r==0 -> -inf -> always accept
    if Bp != B:
        # TODO(synk): supply B as a multiple of 8 to avoid this extra HBM pass over eta.
        pad = Bp - B
        xs_f = jnp.pad(xs_f, ((0, pad), (0, 0)))
        c = jnp.pad(c, ((0, pad), (0, 0)))
        e_const = jnp.pad(e_const, ((0, pad), (0, 0)))
        eta_f = jnp.pad(eta_f, ((0, 0), (0, 0), (0, pad), (0, 0)))
        logr_f = jnp.pad(logr_f, ((0, 0), (0, pad), (0, 0)))

    kernel = functools.partial(
        _mala_kernel, stepsize=stepsize, scale=scale, inv_scale=inv_scale,
        lang_steps=L, k_chunk=K)

    # G is DMA'd exactly once (constant index_map); single-buffer it when it is big
    # so it does not double its VMEM residency (matters on v7x's 64 MiB VMEM).
    if D * D * 4 >= (4 << 20):
        g_spec = pl.BlockSpec((D, D), lambda b, m: (0, 0),
                              pipeline_mode=pl.Buffered(1))
    else:
        g_spec = pl.BlockSpec((D, D), lambda b, m: (0, 0))
    # TODO(synk): for very large D on v7x, also cast G / z to bf16 for the matmul
    # (keep preferred_element_type=f32) or tile the contraction dimension.

    grid = (n_btiles, Mc)   # metropolis-chunk axis LAST (innermost, sequential carry)

    zs_p, ediff_p = pl.pallas_call(
        kernel,
        out_shape=(jax.ShapeDtypeStruct((Bp, D), f32),
                   jax.ShapeDtypeStruct((Bp, 1), f32)),
        grid_spec=pltpu.PrefetchScalarGridSpec(
            num_scalar_prefetch=0,
            grid=grid,
            in_specs=[
                pl.BlockSpec((Bt, D), lambda b, m: (b, 0)),               # xs
                g_spec,                                                   # G
                pl.BlockSpec((Bt, D), lambda b, m: (b, 0)),               # c
                pl.BlockSpec((Bt, 1), lambda b, m: (b, 0)),               # e_const
                pl.BlockSpec((K, L, Bt, D), lambda b, m: (m, 0, b, 0)),   # eta chunk
                pl.BlockSpec((K, Bt, 1), lambda b, m: (m, b, 0)),         # log r chunk
            ],
            out_specs=(
                pl.BlockSpec((Bt, D), lambda b, m: (b, 0)),               # zs
                pl.BlockSpec((Bt, 1), lambda b, m: (b, 0)),               # e - e0
            ),
            scratch_shapes=[
                pltpu.VMEM((Bt, D), f32),   # x_sc    (current state, carried over m)
                pltpu.VMEM((Bt, D), f32),   # grad_sc (grad at current state)
                pltpu.VMEM((Bt, 1), f32),   # ecur_sc (energy at current state)
                pltpu.VMEM((Bt, 1), f32),   # e0_sc   (initial energy)
            ]),
        compiler_params=pltpu.CompilerParams(
            dimension_semantics=("parallel", "arbitrary"),
            # Safe on every generation (v7x has 64 MiB/TC); v5e/v6e (128 MiB) could
            # raise this further to allow even larger K chunks / deeper eta buffering.
            vmem_limit_bytes=48 * 1024 * 1024),
    )(xs_f, G, c, e_const, eta_f, logr_f)

    return zs_p[:B], ediff_p[:B, 0]


# ------------------------- pure-JAX reference (for sanity) -----------------------
def _reference(xs, ys, W, eta, r_unif, *, lambd, stepsize, M, L, beta=1.0):
    """Torch-structured reference (recomputes energy/grad every call, exp-form
    accept test) using the same fused quadratic form as the kernel."""
    D = xs.shape[1]
    G = lambd * (W.T @ W) + (1.0 - lambd) * jnp.eye(D, dtype=jnp.float32)
    c = lambd * (ys @ W)
    e_const = lambd * 0.5 * jnp.sum(ys * ys, axis=1)

    def egrad(z):
        v = z @ G
        e = 0.5 * jnp.sum(z * v, axis=1) - jnp.sum(z * c, axis=1) + e_const
        return v - c, e

    scale = math.sqrt(2.0 * stepsize / beta)
    x_curr = xs
    e0 = egrad(x_curr)[1]
    acc = rej = e_curr = e_prop = None
    for m in range(M):
        logdet = jnp.zeros((xs.shape[0],))
        xl = x_curr
        for i in range(L):
            et = eta[m * L + i]
            gx, ex = egrad(xl)
            if i == 0:
                energy_x = ex
            y = xl - stepsize * gx + scale * et
            gy, energy_y = egrad(y)
            eb = (xl - y + stepsize * gy) / scale
            logdet = logdet + 0.5 * jnp.sum(et * et - eb * eb, axis=1)
            xl = y
        e_curr, e_prop = energy_x, energy_y
        prob = jnp.exp(-e_prop + e_curr + logdet)
        acc = (r_unif[m, :, 0] < prob).astype(jnp.float32)[:, None]
        rej = 1.0 - acc
        x_curr = rej * x_curr + acc * xl
    e = rej[:, 0] * e_curr + acc[:, 0] * e_prop
    return x_curr, e - e0


def _wform_energy_grad(z, ys, W, lambd):
    """Original (un-fused) torch-style energy/grad, used to validate the fusion."""
    res = z @ W.T - ys
    e = lambd * 0.5 * jnp.sum(res * res, axis=1) \
        + (1.0 - lambd) * 0.5 * jnp.sum(z * z, axis=1)
    g = lambd * (res @ W) + (1.0 - lambd) * z
    return g, e


if __name__ == "__main__":
    B, D, Dy = 24, 32, 16
    lambd = 0.5
    metr_steps_per_block = 4
    lang_steps = 2
    stepsize = 1e-3

    key = jax.random.PRNGKey(0)
    k_x, k_y, k_w, k_eta, k_u = jax.random.split(key, 5)

    xs = jax.random.normal(k_x, (B, D), dtype=jnp.float32)
    ys = jax.random.normal(k_y, (B, Dy), dtype=jnp.float32)          # conditioning c
    W = 0.1 * jax.random.normal(k_w, (Dy, D), dtype=jnp.float32)     # synthetic log-posterior
    eta = jax.random.normal(
        k_eta, (metr_steps_per_block * lang_steps, B, D), dtype=jnp.float32)
    r_unif = jax.random.uniform(
        k_u, (metr_steps_per_block, B, 1), dtype=jnp.float32)

    zs_ref, e_ref = _reference(xs, ys, W, eta, r_unif,
                               lambd=lambd, stepsize=stepsize,
                               M=metr_steps_per_block, L=lang_steps)

    # Algebra check: fused G/c/e_const form (folded reduction) vs original W-form.
    G = lambd * (W.T @ W) + (1.0 - lambd) * jnp.eye(D, dtype=jnp.float32)
    c = lambd * (ys @ W)
    e_const = lambd * 0.5 * jnp.sum(ys * ys, axis=1)
    g_fused = xs @ G - c
    e_fused = 0.5 * jnp.sum(xs * (g_fused - c), axis=1) + e_const
    g_w, e_w = _wform_energy_grad(xs, ys, W, lambd)
    assert jnp.allclose(e_fused, e_w, rtol=1e-4, atol=1e-3)
    assert jnp.allclose(g_fused, g_w, rtol=1e-4, atol=1e-3)

    # Kernel: auto chunk (K=M -> single metropolis grid step), explicit K=2
    # (exercises the cross-chunk scratch carry), and K=1 (per-step streaming).
    for kc in (None, 2, 1):
        zs, e_diff = mala_layer_forward(
            xs, ys, W, eta, r_unif,
            lambd=lambd, stepsize=stepsize,
            metr_steps_per_block=metr_steps_per_block, lang_steps=lang_steps,
            k_chunk=kc)
        zs, e_diff = jax.block_until_ready((zs, e_diff))
        assert zs.shape == (B, D) and e_diff.shape == (B,)
        assert bool(jnp.all(jnp.isfinite(zs))) and bool(jnp.all(jnp.isfinite(e_diff)))
        assert jnp.allclose(zs, zs_ref, rtol=1e-4, atol=1e-4), f"zs mismatch (k_chunk={kc})"
        assert jnp.allclose(e_diff, e_ref, rtol=1e-3, atol=1e-3), f"e mismatch (k_chunk={kc})"

    print("KERNEL_OK")
</pallas_src>

<mosaic_0001>
module attributes {stable_mosaic.version = 11 : i64} {
  func.func @_mala_kernel(%arg0: i32, %arg1: i32, %arg2: memref<8x32xf32, #tpu.memory_space<vmem>>, %arg3: memref<32x32xf32, #tpu.memory_space<vmem>>, %arg4: memref<8x32xf32, #tpu.memory_space<vmem>>, %arg5: memref<8x1xf32, #tpu.memory_space<vmem>>, %arg6: memref<4x2x8x32xf32, #tpu.memory_space<vmem>>, %arg7: memref<4x8x1xf32, #tpu.memory_space<vmem>>, %arg8: memref<8x32xf32, #tpu.memory_space<vmem>>, %arg9: memref<8x1xf32, #tpu.memory_space<vmem>>, %arg10: memref<8x32xf32, #tpu.memory_space<vmem>>, %arg11: memref<8x32xf32, #tpu.memory_space<vmem>>, %arg12: memref<8x1xf32, #tpu.memory_space<vmem>>, %arg13: memref<8x1xf32, #tpu.memory_space<vmem>>) attributes {dimension_semantics = [#tpu.dimension_semantics<parallel>, #tpu.dimension_semantics<arbitrary>], iteration_bounds = array<i64: 3, 1>, scalar_prefetch = 0 : i64, scratch_operands = 4 : i64, tpu.core_type = #tpu.core_type<tc>, window_params = [{transform_indices = @transform_0, window_bounds = array<i64: 8, 32>}, {pipeline_mode = #tpu.pipeline_mode<synchronous>, transform_indices = @transform_1, window_bounds = array<i64: 32, 32>}, {transform_indices = @transform_2, window_bounds = array<i64: 8, 32>}, {transform_indices = @transform_3, window_bounds = array<i64: 8, 1>}, {transform_indices = @transform_4, window_bounds = array<i64: 4, 2, 8, 32>}, {transform_indices = @transform_5, window_bounds = array<i64: 4, 8, 1>}, {transform_indices = @transform_6, window_bounds = array<i64: 8, 32>}, {transform_indices = @transform_7, window_bounds = array<i64: 8, 1>}]} {
    %c0 = arith.constant 0 : index
    %c0_0 = arith.constant 0 : index
    %0 = vector.load %arg3[%c0, %c0_0] : memref<32x32xf32, #tpu.memory_space<vmem>>, vector<32x32xf32>
    %c0_1 = arith.constant 0 : index
    %c0_2 = arith.constant 0 : index
    %1 = vector.load %arg4[%c0_1, %c0_2] : memref<8x32xf32, #tpu.memory_space<vmem>>, vector<8x32xf32>
    %c0_3 = arith.constant 0 : index
    %c0_4 = arith.constant 0 : index
    %2 = vector.load %arg5[%c0_3, %c0_4] : memref<8x1xf32, #tpu.memory_space<vmem>>, vector<8x1xf32>
    %c0_i32 = arith.constant 0 : i32
    %3 = arith.cmpi eq, %arg1, %c0_i32 : i32
    %4 = arith.extui %3 : i1 to i32
    %c0_i32_5 = arith.constant 0 : i32
    %5 = arith.cmpi ne, %4, %c0_i32_5 : i32
    scf.if %5 {
      %c0_22 = arith.constant 0 : index
      %c0_23 = arith.constant 0 : index
      %17 = vector.load %arg2[%c0_22, %c0_23] : memref<8x32xf32, #tpu.memory_space<vmem>>, vector<8x32xf32>
      %cst = arith.constant dense<0.000000e+00> : vector<8x32xf32>
      %18 = tpu.matmul %17, %0, %cst {dimension_numbers = #tpu.dot_dimension_numbers<[1], [0], [0], [1], [0, 0, 1, 1], [], []>} : vector<8x32xf32>, vector<32x32xf32>, vector<8x32xf32> -> vector<8x32xf32>
      %19 = arith.subf %18, %1 : vector<8x32xf32>
      %20 = arith.subf %19, %1 : vector<8x32xf32>
      %21 = arith.mulf %17, %20 : vector<8x32xf32>
      %cst_24 = arith.constant dense<0.000000e+00> : vector<8xf32>
      %22 = vector.multi_reduction <add>, %21, %cst_24 [1] : vector<8x32xf32> to vector<8xf32>
      %23 = vector.shape_cast %22 : vector<8xf32> to vector<8x1xf32>
      %cst_25 = arith.constant 5.000000e-01 : f32
      %24 = vector.broadcast %cst_25 : f32 to vector<8x1xf32>
      %25 = arith.mulf %24, %23 : vector<8x1xf32>
      %26 = arith.addf %25, %2 : vector<8x1xf32>
      %c0_26 = arith.constant 0 : index
      %c0_27 = arith.constant 0 : index
      %27 = vector.load %arg10[%c0_26, %c0_27] : memref<8x32xf32, #tpu.memory_space<vmem>>, vector<8x32xf32>
      tpu.vector_store %arg10[%c0_26, %c0_27], %17 {strides = array<i32>} : memref<8x32xf32, #tpu.memory_space<vmem>>, vector<8x32xf32>,
      %c0_28 = arith.constant 0 : index
      %c0_29 = arith.constant 0 : index
      %28 = vector.load %arg11[%c0_28, %c0_29] : memref<8x32xf32, #tpu.memory_space<vmem>>, vector<8x32xf32>
      tpu.vector_store %arg11[%c0_28, %c0_29], %19 {strides = array<i32>} : memref<8x32xf32, #tpu.memory_space<vmem>>, vector<8x32xf32>,
      %c0_30 = arith.constant 0 : index
      %c0_31 = arith.constant 0 : index
      %29 = vector.load %arg12[%c0_30, %c0_31] : memref<8x1xf32, #tpu.memory_space<vmem>>, vector<8x1xf32>
      tpu.vector_store %arg12[%c0_30, %c0_31], %26 {strides = array<i32>} : memref<8x1xf32, #tpu.memory_space<vmem>>, vector<8x1xf32>,
      %c0_32 = arith.constant 0 : index
      %c0_33 = arith.constant 0 : index
      %30 = vector.load %arg13[%c0_32, %c0_33] : memref<8x1xf32, #tpu.memory_space<vmem>>, vector<8x1xf32>
      tpu.vector_store %arg13[%c0_32, %c0_33], %26 {strides = array<i32>} : memref<8x1xf32, #tpu.memory_space<vmem>>, vector<8x1xf32>,
    } else {
    }
    %c0_6 = arith.constant 0 : index
    %c0_7 = arith.constant 0 : index
    %6 = vector.load %arg10[%c0_6, %c0_7] : memref<8x32xf32, #tpu.memory_space<vmem>>, vector<8x32xf32>
    %c0_8 = arith.constant 0 : index
    %c0_9 = arith.constant 0 : index
    %7 = vector.load %arg11[%c0_8, %c0_9] : memref<8x32xf32, #tpu.memory_space<vmem>>, vector<8x32xf32>
    %c0_10 = arith.constant 0 : index
    %c0_11 = arith.constant 0 : index
    %8 = vector.load %arg12[%c0_10, %c0_11] : memref<8x1xf32, #tpu.memory_space<vmem>>, vector<8x1xf32>
    %c0_i32_12 = arith.constant 0 : i32
    %c4_i32 = arith.constant 4 : i32
    %9 = arith.addi %c0_i32_12, %c4_i32 : i32
    %c1_i32 = arith.constant 1 : i32
    %10:3 = scf.for %arg14 = %c0_i32_12 to %9 step %c1_i32 iter_args(%arg15 = %6, %arg16 = %7, %arg17 = %8) -> (vector<8x32xf32>, vector<8x32xf32>, vector<8x1xf32>)  : i32 {
      %cst = arith.constant 0.000000e+00 : f32
      %17 = vector.broadcast %cst : f32 to vector<8x1xf32>
      %c0_i32_22 = arith.constant 0 : i32
      %18 = arith.index_cast %arg14 : i32 to index
      %19 = arith.index_cast %c0_i32_22 : i32 to index
      %c0_23 = arith.constant 0 : index
      %c0_24 = arith.constant 0 : index
      %20 = vector.load %arg6[%18, %19, %c0_23, %c0_24] : memref<4x2x8x32xf32, #tpu.memory_space<vmem>>, vector<1x1x8x32xf32>
      %21 = vector.shape_cast %20 : vector<1x1x8x32xf32> to vector<8x32xf32>
      %cst_25 = arith.constant 1.000000e-03 : f32
      %22 = vector.broadcast %cst_25 : f32 to vector<8x32xf32>
      %23 = arith.mulf %22, %arg16 : vector<8x32xf32>
      %24 = arith.subf %arg15, %23 : vector<8x32xf32>
      %cst_26 = arith.constant 0.0447213612 : f32
      %25 = vector.broadcast %cst_26 : f32 to vector<8x32xf32>
      %26 = arith.mulf %25, %21 : vector<8x32xf32>
      %27 = arith.addf %24, %26 : vector<8x32xf32>
      %cst_27 = arith.constant dense<0.000000e+00> : vector<8x32xf32>
      %28 = tpu.matmul %27, %0, %cst_27 {dimension_numbers = #tpu.dot_dimension_numbers<[1], [0], [0], [1], [0, 0, 1, 1], [], []>} : vector<8x32xf32>, vector<32x32xf32>, vector<8x32xf32> -> vector<8x32xf32>
      %29 = arith.subf %28, %1 : vector<8x32xf32>
      %30 = arith.subf %arg15, %27 : vector<8x32xf32>
      %cst_28 = arith.constant 1.000000e-03 : f32
      %31 = vector.broadcast %cst_28 : f32 to vector<8x32xf32>
      %32 = arith.mulf %31, %29 : vector<8x32xf32>
      %33 = arith.addf %30, %32 : vector<8x32xf32>
      %cst_29 = arith.constant 22.3606796 : f32
      %34 = vector.broadcast %cst_29 : f32 to vector<8x32xf32>
      %35 = arith.mulf %33, %34 : vector<8x32xf32>
      %36 = arith.mulf %21, %21 : vector<8x32xf32>
      %37 = arith.mulf %35, %35 : vector<8x32xf32>
      %38 = arith.subf %36, %37 : vector<8x32xf32>
      %cst_30 = arith.constant dense<0.000000e+00> : vector<8xf32>
      %39 = vector.multi_reduction <add>, %38, %cst_30 [1] : vector<8x32xf32> to vector<8xf32>
      %40 = vector.shape_cast %39 : vector<8xf32> to vector<8x1xf32>
      %cst_31 = arith.constant 5.000000e-01 : f32
      %41 = vector.broadcast %cst_31 : f32 to vector<8x1xf32>
      %42 = arith.mulf %41, %40 : vector<8x1xf32>
      %43 = arith.addf %17, %42 : vector<8x1xf32>
      %c1_i32_32 = arith.constant 1 : i32
      %44 = arith.index_cast %arg14 : i32 to index
      %c1 = arith.constant 1 : index
      %c0_33 = arith.constant 0 : index
      %c0_34 = arith.constant 0 : index
      %45 = vector.load %arg6[%44, %c1, %c0_33, %c0_34] : memref<4x2x8x32xf32, #tpu.memory_space<vmem>>, vector<1x1x8x32xf32>
      %46 = vector.shape_cast %45 : vector<1x1x8x32xf32> to vector<8x32xf32>
      %cst_35 = arith.constant 1.000000e-03 : f32
      %47 = vector.broadcast %cst_35 : f32 to vector<8x32xf32>
      %48 = arith.mulf %47, %29 : vector<8x32xf32>
      %49 = arith.subf %27, %48 : vector<8x32xf32>
      %cst_36 = arith.constant 0.0447213612 : f32
      %50 = vector.broadcast %cst_36 : f32 to vector<8x32xf32>
      %51 = arith.mulf %50, %46 : vector<8x32xf32>
      %52 = arith.addf %49, %51 : vector<8x32xf32>
      %cst_37 = arith.constant dense<0.000000e+00> : vector<8x32xf32>
      %53 = tpu.matmul %52, %0, %cst_37 {dimension_numbers = #tpu.dot_dimension_numbers<[1], [0], [0], [1], [0, 0, 1, 1], [], []>} : vector<8x32xf32>, vector<32x32xf32>, vector<8x32xf32> -> vector<8x32xf32>
      %54 = arith.subf %53, %1 : vector<8x32xf32>
      %55 = arith.subf %54, %1 : vector<8x32xf32>
      %56 = arith.mulf %52, %55 : vector<8x32xf32>
      %cst_38 = arith.constant dense<0.000000e+00> : vector<8xf32>
      %57 = vector.multi_reduction <add>, %56, %cst_38 [1] : vector<8x32xf32> to vector<8xf32>
      %58 = vector.shape_cast %57 : vector<8xf32> to vector<8x1xf32>
      %cst_39 = arith.constant 5.000000e-01 : f32
      %59 = vector.broadcast %cst_39 : f32 to vector<8x1xf32>
      %60 = arith.mulf %59, %58 : vector<8x1xf32>
      %61 = arith.addf %60, %2 : vector<8x1xf32>
      %62 = arith.subf %27, %52 : vector<8x32xf32>
      %cst_40 = arith.constant 1.000000e-03 : f32
      %63 = vector.broadcast %cst_40 : f32 to vector<8x32xf32>
      %64 = arith.mulf %63, %54 : vector<8x32xf32>
      %65 = arith.addf %62, %64 : vector<8x32xf32>
      %cst_41 = arith.constant 22.3606796 : f32
      %66 = vector.broadcast %cst_41 : f32 to vector<8x32xf32>
      %67 = arith.mulf %65, %66 : vector<8x32xf32>
      %68 = arith.mulf %46, %46 : vector<8x32xf32>
      %69 = arith.mulf %67, %67 : vector<8x32xf32>
      %70 = arith.subf %68, %69 : vector<8x32xf32>
      %cst_42 = arith.constant dense<0.000000e+00> : vector<8xf32>
      %71 = vector.multi_reduction <add>, %70, %cst_42 [1] : vector<8x32xf32> to vector<8xf32>
      %72 = vector.shape_cast %71 : vector<8xf32> to vector<8x1xf32>
      %cst_43 = arith.constant 5.000000e-01 : f32
      %73 = vector.broadcast %cst_43 : f32 to vector<8x1xf32>
      %74 = arith.mulf %73, %72 : vector<8x1xf32>
      %75 = arith.addf %43, %74 : vector<8x1xf32>
      %76 = arith.index_cast %arg14 : i32 to index
      %c0_44 = arith.constant 0 : index
      %c0_45 = arith.constant 0 : index
      %77 = vector.load %arg7[%76, %c0_44, %c0_45] : memref<4x8x1xf32, #tpu.memory_space<vmem>>, vector<1x8x1xf32>
      %78 = vector.shape_cast %77 : vector<1x8x1xf32> to vector<8x1xf32>
      %79 = arith.subf %arg17, %61 : vector<8x1xf32>
      %80 = arith.addf %79, %75 : vector<8x1xf32>
      %81 = arith.cmpf olt, %78, %80 : vector<8x1xf32>
      %82 = vector.shape_cast %81 : vector<8x1xi1> to vector<8x1xi1>
      %83 = vector.broadcast %82 : vector<8x1xi1> to vector<8x32xi1>
      %84 = arith.select %83, %52, %arg15 : vector<8x32xi1>, vector<8x32xf32>
      %85 = vector.shape_cast %81 : vector<8x1xi1> to vector<8x1xi1>
      %86 = vector.broadcast %85 : vector<8x1xi1> to vector<8x32xi1>
      %87 = arith.select %86, %54, %arg16 : vector<8x32xi1>, vector<8x32xf32>
      %88 = arith.select %81, %61, %arg17 : vector<8x1xi1>, vector<8x1xf32>
      scf.yield %84, %87, %88 : vector<8x32xf32>, vector<8x32xf32>, vector<8x1xf32>
    }
    %c4_i32_13 = arith.constant 4 : i32
    %c0_14 = arith.constant 0 : index
    %c0_15 = arith.constant 0 : index
    %11 = vector.load %arg10[%c0_14, %c0_15] : memref<8x32xf32, #tpu.memory_space<vmem>>, vector<8x32xf32>
    tpu.vector_store %arg10[%c0_14, %c0_15], %10#0 {strides = array<i32>} : memref<8x32xf32, #tpu.memory_space<vmem>>, vector<8x32xf32>,
    %c0_16 = arith.constant 0 : index
    %c0_17 = arith.constant 0 : index
    %12 = vector.load %arg11[%c0_16, %c0_17] : memref<8x32xf32, #tpu.memory_space<vmem>>, vector<8x32xf32>
    tpu.vector_store %arg11[%c0_16, %c0_17], %10#1 {strides = array<i32>} : memref<8x32xf32, #tpu.memory_space<vmem>>, vector<8x32xf32>,
    %c0_18 = arith.constant 0 : index
    %c0_19 = arith.constant 0 : index
    %13 = vector.load %arg12[%c0_18, %c0_19] : memref<8x1xf32, #tpu.memory_space<vmem>>, vector<8x1xf32>
    tpu.vector_store %arg12[%c0_18, %c0_19], %10#2 {strides = array<i32>} : memref<8x1xf32, #tpu.memory_space<vmem>>, vector<8x1xf32>,
    %c0_i32_20 = arith.constant 0 : i32
    %14 = arith.cmpi eq, %arg1, %c0_i32_20 : i32
    %15 = arith.extui %14 : i1 to i32
    %c0_i32_21 = arith.constant 0 : i32
    %16 = arith.cmpi ne, %15, %c0_i32_21 : i32
    scf.if %16 {
      %c0_22 = arith.constant 0 : index
      %c0_23 = arith.constant 0 : index
      %17 = vector.load %arg8[%c0_22, %c0_23] : memref<8x32xf32, #tpu.memory_space<vmem>>, vector<8x32xf32>
      tpu.vector_store %arg8[%c0_22, %c0_23], %10#0 {strides = array<i32>} : memref<8x32xf32, #tpu.memory_space<vmem>>, vector<8x32xf32>,
      %c0_24 = arith.constant 0 : index
      %c0_25 = arith.constant 0 : index
      %18 = vector.load %arg13[%c0_24, %c0_25] : memref<8x1xf32, #tpu.memory_space<vmem>>, vector<8x1xf32>
      %19 = arith.subf %10#2, %18 : vector<8x1xf32>
      %c0_26 = arith.constant 0 : index
      %c0_27 = arith.constant 0 : index
      %20 = vector.load %arg9[%c0_26, %c0_27] : memref<8x1xf32, #tpu.memory_space<vmem>>, vector<8x1xf32>
      tpu.vector_store %arg9[%c0_26, %c0_27], %19 {strides = array<i32>} : memref<8x1xf32, #tpu.memory_space<vmem>>, vector<8x1xf32>,
    } else {
    }
    return
  }
  func.func @transform_0(%arg0: i32, %arg1: i32) -> (i32, i32) {
    %c0_i32 = arith.constant 0 : i32
    %c0_i32_0 = arith.constant 0 : i32
    return %arg0, %c0_i32 : i32, i32
  }
  func.func @transform_1(%arg0: i32, %arg1: i32) -> (i32, i32) {
    %c0_i32 = arith.constant 0 : i32
    %c0_i32_0 = arith.constant 0 : i32
    %c0_i32_1 = arith.constant 0 : i32
    return %c0_i32, %c0_i32_0 : i32, i32
  }
  func.func @transform_2(%arg0: i32, %arg1: i32) -> (i32, i32) {
    %c0_i32 = arith.constant 0 : i32
    %c0_i32_0 = arith.constant 0 : i32
    return %arg0, %c0_i32 : i32, i32
  }
  func.func @transform_3(%arg0: i32, %arg1: i32) -> (i32, i32) {
    %c0_i32 = arith.constant 0 : i32
    %c0_i32_0 = arith.constant 0 : i32
    return %arg0, %c0_i32 : i32, i32
  }
  func.func @transform_4(%arg0: i32, %arg1: i32) -> (i32, i32, i32, i32) {
    %c0_i32 = arith.constant 0 : i32
    %c0_i32_0 = arith.constant 0 : i32
    %c0_i32_1 = arith.constant 0 : i32
    return %arg1, %c0_i32, %arg0, %c0_i32_0 : i32, i32, i32, i32
  }
  func.func @transform_5(%arg0: i32, %arg1: i32) -> (i32, i32, i32) {
    %c0_i32 = arith.constant 0 : i32
    %c0_i32_0 = arith.constant 0 : i32
    return %arg1, %arg0, %c0_i32 : i32, i32, i32
  }
  func.func @transform_6(%arg0: i32, %arg1: i32) -> (i32, i32) {
    %c0_i32 = arith.constant 0 : i32
    %c0_i32_0 = arith.constant 0 : i32
    return %arg0, %c0_i32 : i32, i32
  }
  func.func @transform_7(%arg0: i32, %arg1: i32) -> (i32, i32) {
    %c0_i32 = arith.constant 0 : i32
    %c0_i32_0 = arith.constant 0 : i32
    return %arg0, %c0_i32 : i32, i32
  }
}

</mosaic_0001>

<llo_original>
// kernel: tpu_custom_call.1
$region0: #{tpu_custom_call.1}
  #allocation0 [shape = 'u32[]', space=smem, size = 0x4, offset = 0x4, fixed_abs, tag = 'smem constant byte address 0x4 - core index']
  #allocation1 [shape = 'u32[144,128]{1,0:T(1,128)}', space=vmem, size = 0x12000, scoped, tag = 'internal scratch']
  #allocation2 [shape = 'f32[8,32]{1,0:T(8,128)}', space=vmem, size = 0x1000, scoped, tag = 'scratch operand']
  #allocation3 [shape = 'f32[8,32]{1,0:T(8,128)}', space=vmem, size = 0x1000, scoped, tag = 'scratch operand']
  #allocation4 [shape = 'f32[8,1]{1,0:T(8,128)}', space=vmem, size = 0x1000, scoped, tag = 'scratch operand']
  #allocation5 [shape = 'f32[8,1]{1,0:T(8,128)}', space=vmem, size = 0x1000, scoped, tag = 'scratch operand']
  %s0 = inlined_call_operand.vmem [shape: f32[24,32], index: 0, kind: input, shape index: {}]
  %s1 = inlined_call_operand.vmem [shape: f32[32,32], index: 1, kind: input, shape index: {}]
  %s2 = inlined_call_operand.vmem [shape: f32[24,32], index: 2, kind: input, shape index: {}]
  %s3 = inlined_call_operand.vmem [shape: f32[24,1], index: 3, kind: input, shape index: {}]
  %s4 = inlined_call_operand.hbm [shape: f32[4,2,24,32], index: 4, kind: input, shape index: {}]
  %s5 = inlined_call_operand.vmem [shape: f32[4,24,1], index: 5, kind: input, shape index: {}]
  %s6 = inlined_call_operand.hbm [shape: f32[24,32], index: 6, kind: output, shape index: {0}]
  %s7 = inlined_call_operand.vmem [shape: f32[24,1], index: 7, kind: output, shape index: {1}]
  %8 = xla_tuple %s6, %s7
  %s9 = sld [smem:[#allocation0]]
  $region122: #{tpu_custom_call.1} parent=0
    _
  %s11 = ssub.s32 1, %s9
  %s12 = scalar_select 0, %s11, %s9
  $region1: #{tpu_custom_call.1} parent=0
    #allocation6 [shape = 'u8[65536]{0}', space=vmem, size = 0x10000, scoped, tag = 'input window, operand 4']
    #allocation7 [shape = 's32[2]{0}', space=sflag, size = 0x8, scoped, tag = 'scoped memory for tpu_custom_call.1']
    #allocation8 [shape = 's32[2]{0}', space=sflag, size = 0x8, scoped, tag = 'scoped memory for tpu_custom_call.1']
    #allocation9 [shape = 'u8[32768]{0}', space=vmem, size = 0x8000, scoped, tag = 'input window, operand 5']
    #allocation10 [shape = 'u8[8192]{0}', space=vmem, size = 0x2000, scoped, tag = 'output window, operand 0']
    %13 = vsyncpa [#allocation7], 0
    %s14 = scalar_lea.sflag [#allocation7], 1
    %15 = vsyncpa %s14, 0
    %16 = vsyncpa [#allocation8], 0
    %s17 = scalar_lea.sflag [#allocation8], 1
    %18 = vsyncpa %s17, 0
    loop: start=0, step=1, limit=5
    $region2: #{tpu_custom_call.1} parent=1 // loop_pre_header
      _
    $region3: #{tpu_custom_call.1} parent=1 // loop_header
      %s20 = sphi 0, %s24
      %p21 = scmp.ge.s32.totalorder %s20, 5
      %s27 = sphi 0, %s39
      %s28 = sphi 0, %s35
      %s29 = sphi 0, %s27
      %s30 = sphi 0, %s28
      %s31 = sphi 0, %s29
      %s32 = sphi 0, %s30
      %s42 = sphi 0, %s44
      %s45 = sphi 0, %s42
      %s46 = sphi 0, %s45
      %s62 = sphi 0, %s46
      %s66 = sphi 0, %s66
      %s68 = sphi 0, %s66
      %s69 = sphi 0, %s68
      %s83 = sphi 0, %s69
      %s89 = sphi 0, %s91
      %s92 = sphi 0, %s89
      %s93 = sphi 0, %s92
      %s109 = sphi 0, %s93
      %s115 = sphi 0, %s117
      %s118 = sphi 0, %s115
      %s119 = sphi 0, %s118
      %s135 = sphi 0, %s119
      %s143 = sphi 0, %s145
      %s146 = sphi 0, %s143
      %s147 = sphi 0, %s146
      %s163 = sphi 0, %s147
      %s171 = sphi 0, %s173
      %s174 = sphi 0, %s171
      %s175 = sphi 0, %s174
      %s191 = sphi 0, %s175
      %s197 = sphi 0, %s199
      %s200 = sphi 0, %s197
      %s201 = sphi 0, %s200
      %s217 = sphi 0, %s201
      %s223 = sphi 0, %s225
      %s226 = sphi 0, %s223
      %s227 = sphi 0, %s226
      %s243 = sphi 0, %s227
    $region4: #{tpu_custom_call.1} parent=1 // loop_header_branch
      %23 = sbr.rel (%p21) target = $region8
    $region5: #{tpu_custom_call.1} parent=1 // loop_body
      %s25 = ssub.s32 %s20, 1
      %s26 = ssub.s32 %s20, 2
      %s33 = sadd.s32 1, %s28
      %p34 = scmp.ge.s32.totalorder %s33, 1
      %s35 = scalar_select %p34, 0, %s33
      %s36 = sadd.s32 1, %s27
      %s37 = scalar_select %p34, %s36, %s27
      %p38 = scmp.ge.s32.totalorder %s37, 3
      %s39 = scalar_select %p38, 0, %s37
      %s40 = ssub.s32 %s27, %s39
      %p41 = scmp.eq.s32.totalorder %s40, 0
      %s43 = sadd.s32 %s42, 1
      %s44 = scalar_select %p41, %s42, %s43
      %p47 = pneg %p41
      %p48 = scmp.eq.s32.totalorder %s20, 2
      %p49 = por %p47, %p48
      %p50 = scmp.ne.s32.totalorder %s42, %s45
      %p51 = scmp.eq.s32.totalorder %s20, 0
      %p52 = por %p50, %p51
      %p53 = scmp.ne.s32.totalorder %s42, %s45
      %p54 = scmp.eq.s32.totalorder %s25, 2
      %p55 = por %p53, %p54
      %p56 = scmp.ne.s32.totalorder %s45, %s46
      %p57 = scmp.eq.s32.totalorder %s25, 0
      %p58 = por %p56, %p57
      %p59 = scmp.ne.s32.totalorder %s45, %s46
      %p60 = scmp.eq.s32.totalorder %s26, 2
      %p61 = por %p59, %p60
      %p63 = scmp.ne.s32.totalorder %s46, %s62
      %p64 = scmp.eq.s32.totalorder %s26, 0
      %p65 = por %p63, %p64
      %s67 = sadd.s32 %s66, 1
      %p70 = scmp.eq.s32.totalorder %s20, 2
      %p71 = scmp.ne.s32.totalorder %s66, %s68
      %p72 = scmp.eq.s32.totalorder %s20, 0
      %p73 = por %p71, %p72
      %p74 = scmp.ne.s32.totalorder %s66, %s68
      %p75 = scmp.eq.s32.totalorder %s25, 2
      %p76 = por %p74, %p75
      %p77 = scmp.ne.s32.totalorder %s68, %s69
      %p78 = scmp.eq.s32.totalorder %s25, 0
      %p79 = por %p77, %p78
      %p80 = scmp.ne.s32.totalorder %s68, %s69
      %p81 = scmp.eq.s32.totalorder %s26, 2
      %p82 = por %p80, %p81
      %p84 = scmp.ne.s32.totalorder %s69, %s83
      %p85 = scmp.eq.s32.totalorder %s26, 0
      %p86 = por %p84, %p85
      %s87 = ssub.s32 %s27, %s39
      %p88 = scmp.eq.s32.totalorder %s87, 0
      %s90 = sadd.s32 %s89, 1
      %s91 = scalar_select %p88, %s89, %s90
      %p94 = pneg %p88
      %p95 = scmp.eq.s32.totalorder %s20, 2
      %p96 = por %p94, %p95
      %p97 = scmp.ne.s32.totalorder %s89, %s92
      %p98 = scmp.eq.s32.totalorder %s20, 0
      %p99 = por %p97, %p98
      %p100 = scmp.ne.s32.totalorder %s89, %s92
      %p101 = scmp.eq.s32.totalorder %s25, 2
      %p102 = por %p100, %p101
      %p103 = scmp.ne.s32.totalorder %s92, %s93
      %p104 = scmp.eq.s32.totalorder %s25, 0
      %p105 = por %p103, %p104
      %p106 = scmp.ne.s32.totalorder %s92, %s93
      %p107 = scmp.eq.s32.totalorder %s26, 2
      %p108 = por %p106, %p107
      %p110 = scmp.ne.s32.totalorder %s93, %s109
      %p111 = scmp.eq.s32.totalorder %s26, 0
      %p112 = por %p110, %p111
      %s113 = ssub.s32 %s27, %s39
      %p114 = scmp.eq.s32.totalorder %s113, 0
      %s116 = sadd.s32 %s115, 1
      %s117 = scalar_select %p114, %s115, %s116
      %p120 = pneg %p114
      %p121 = scmp.eq.s32.totalorder %s20, 2
      %p122 = por %p120, %p121
      %p123 = scmp.ne.s32.totalorder %s115, %s118
      %p124 = scmp.eq.s32.totalorder %s20, 0
      %p125 = por %p123, %p124
      %p126 = scmp.ne.s32.totalorder %s115, %s118
      %p127 = scmp.eq.s32.totalorder %s25, 2
      %p128 = por %p126, %p127
      %p129 = scmp.ne.s32.totalorder %s118, %s119
      %p130 = scmp.eq.s32.totalorder %s25, 0
      %p131 = por %p129, %p130
      %p132 = scmp.ne.s32.totalorder %s118, %s119
      %p133 = scmp.eq.s32.totalorder %s26, 2
      %p134 = por %p132, %p133
      %p136 = scmp.ne.s32.totalorder %s119, %s135
      %p137 = scmp.eq.s32.totalorder %s26, 0
      %p138 = por %p136, %p137
      %s139 = ssub.s32 %s28, %s35
      %s140 = ssub.s32 %s27, %s39
      %s141 = sor.u32 %s139, %s140
      %p142 = scmp.eq.s32.totalorder %s141, 0
      %s144 = sadd.s32 %s143, 1
      %s145 = scalar_select %p142, %s143, %s144
      %p148 = pneg %p142
      %p149 = scmp.eq.s32.totalorder %s20, 2
      %p150 = por %p148, %p149
      %p151 = scmp.ne.s32.totalorder %s143, %s146
      %p152 = scmp.eq.s32.totalorder %s20, 0
      %p153 = por %p151, %p152
      %p154 = scmp.ne.s32.totalorder %s143, %s146
      %p155 = scmp.eq.s32.totalorder %s25, 2
      %p156 = por %p154, %p155
      %p157 = scmp.ne.s32.totalorder %s146, %s147
      %p158 = scmp.eq.s32.totalorder %s25, 0
      %p159 = por %p157, %p158
      %p160 = scmp.ne.s32.totalorder %s146, %s147
      %p161 = scmp.eq.s32.totalorder %s26, 2
      %p162 = por %p160, %p161
      %p164 = scmp.ne.s32.totalorder %s147, %s163
      %p165 = scmp.eq.s32.totalorder %s26, 0
      %p166 = por %p164, %p165
      %s167 = ssub.s32 %s28, %s35
      %s168 = ssub.s32 %s27, %s39
      %s169 = sor.u32 %s167, %s168
      %p170 = scmp.eq.s32.totalorder %s169, 0
      %s172 = sadd.s32 %s171, 1
      %s173 = scalar_select %p170, %s171, %s172
      %p176 = pneg %p170
      %p177 = scmp.eq.s32.totalorder %s20, 2
      %p178 = por %p176, %p177
      %p179 = scmp.ne.s32.totalorder %s171, %s174
      %p180 = scmp.eq.s32.totalorder %s20, 0
      %p181 = por %p179, %p180
      %p182 = scmp.ne.s32.totalorder %s171, %s174
      %p183 = scmp.eq.s32.totalorder %s25, 2
      %p184 = por %p182, %p183
      %p185 = scmp.ne.s32.totalorder %s174, %s175
      %p186 = scmp.eq.s32.totalorder %s25, 0
      %p187 = por %p185, %p186
      %p188 = scmp.ne.s32.totalorder %s174, %s175
      %p189 = scmp.eq.s32.totalorder %s26, 2
      %p190 = por %p188, %p189
      %p192 = scmp.ne.s32.totalorder %s175, %s191
      %p193 = scmp.eq.s32.totalorder %s26, 0
      %p194 = por %p192, %p193
      %s195 = ssub.s32 %s27, %s39
      %p196 = scmp.eq.s32.totalorder %s195, 0
      %s198 = sadd.s32 %s197, 1
      %s199 = scalar_select %p196, %s197, %s198
      %p202 = pneg %p196
      %p203 = scmp.eq.s32.totalorder %s20, 2
      %p204 = por %p202, %p203
      %p205 = scmp.ne.s32.totalorder %s197, %s200
      %p206 = scmp.eq.s32.totalorder %s20, 0
      %p207 = por %p205, %p206
      %p208 = scmp.ne.s32.totalorder %s197, %s200
      %p209 = scmp.eq.s32.totalorder %s25, 2
      %p210 = por %p208, %p209
      %p211 = scmp.ne.s32.totalorder %s200, %s201
      %p212 = scmp.eq.s32.totalorder %s25, 0
      %p213 = por %p211, %p212
      %p214 = scmp.ne.s32.totalorder %s200, %s201
      %p215 = scmp.eq.s32.totalorder %s26, 2
      %p216 = por %p214, %p215
      %p218 = scmp.ne.s32.totalorder %s201, %s217
      %p219 = scmp.eq.s32.totalorder %s26, 0
      %p220 = por %p218, %p219
      %s221 = ssub.s32 %s27, %s39
      %p222 = scmp.eq.s32.totalorder %s221, 0
      %s224 = sadd.s32 %s223, 1
      %s225 = scalar_select %p222, %s223, %s224
      %p228 = pneg %p222
      %p229 = scmp.eq.s32.totalorder %s20, 2
      %p230 = por %p228, %p229
      %p231 = scmp.ne.s32.totalorder %s223, %s226
      %p232 = scmp.eq.s32.totalorder %s20, 0
      %p233 = por %p231, %p232
      %p234 = scmp.ne.s32.totalorder %s223, %s226
      %p235 = scmp.eq.s32.totalorder %s25, 2
      %p236 = por %p234, %p235
      %p237 = scmp.ne.s32.totalorder %s226, %s227
      %p238 = scmp.eq.s32.totalorder %s25, 0
      %p239 = por %p237, %p238
      %p240 = scmp.ne.s32.totalorder %s226, %s227
      %p241 = scmp.eq.s32.totalorder %s26, 2
      %p242 = por %p240, %p241
      %p244 = scmp.ne.s32.totalorder %s227, %s243
      %p245 = scmp.eq.s32.totalorder %s26, 0
      %p246 = por %p244, %p245
      %p247 = scmp.le.s32.totalorder 1, %s20
      %p248 = scmp.lt.s32.totalorder %s20, 4
      %p249 = pnand %p247, %p248
      %p250 = pneg %p249
      // Predicated region
      $region9: #{tpu_custom_call.1} parent=5 // pred_check
        _
      $region10: #{tpu_custom_call.1} parent=5 // pred_check_branch
        %252 = sbr.rel (%p249) target = $region12
      $region11: #{tpu_custom_call.1} parent=5 // pred_region
        %s253 = ssub.s32 %s20, 1
        // Predicated region
        $region13: #{tpu_custom_call.1} parent=11 // pred_check
          %p254 = pneg %p79
        $region14: #{tpu_custom_call.1} parent=11 // pred_check_branch
          %256 = sbr.rel (%p254) target = $region16
        $region15: #{tpu_custom_call.1} parent=11 // pred_region
          _
        $region16: #{tpu_custom_call.1} parent=11 // pred_fallthru
          _
      $region12: #{tpu_custom_call.1} parent=5 // pred_fallthru
        _
      %p257 = scmp.lt.s32.totalorder %s20, 3
      // Predicated region
      $region17: #{tpu_custom_call.1} parent=5 // pred_check
        %p258 = pneg %p257
      $region18: #{tpu_custom_call.1} parent=5 // pred_check_branch
        %260 = sbr.rel (%p258) target = $region20
      $region19: #{tpu_custom_call.1} parent=5 // pred_region
        // Predicated region
        $region21: #{tpu_custom_call.1} parent=19 // pred_check
          %p261 = pneg %p52
        $region22: #{tpu_custom_call.1} parent=19 // pred_check_branch
          %263 = sbr.rel (%p261) target = $region24
        $region23: #{tpu_custom_call.1} parent=19 // pred_region
          %p264 = scmp.lt.s32.totalorder %s27, 2
          %s265 = scalar_select %p264, %s27, 2
          %s266 = smul.addr %s265, 8
          %s267 = scalar_lea.vmem %s0, %s266
        $region24: #{tpu_custom_call.1} parent=19 // pred_fallthru
          _
        // Predicated region
        $region25: #{tpu_custom_call.1} parent=19 // pred_check
          %p268 = pneg %p99
        $region26: #{tpu_custom_call.1} parent=19 // pred_check_branch
          %270 = sbr.rel (%p268) target = $region28
        $region27: #{tpu_custom_call.1} parent=19 // pred_region
          %p271 = scmp.lt.s32.totalorder %s27, 2
          %s272 = scalar_select %p271, %s27, 2
          %s273 = smul.addr %s272, 8
          %s274 = scalar_lea.vmem %s2, %s273
        $region28: #{tpu_custom_call.1} parent=19 // pred_fallthru
          _
        // Predicated region
        $region29: #{tpu_custom_call.1} parent=19 // pred_check
          %p275 = pneg %p125
        $region30: #{tpu_custom_call.1} parent=19 // pred_check_branch
          %277 = sbr.rel (%p275) target = $region32
        $region31: #{tpu_custom_call.1} parent=19 // pred_region
          %p278 = scmp.lt.s32.totalorder %s27, 2
          %s279 = scalar_select %p278, %s27, 2
          %s280 = smul.addr %s279, 8
          %s281 = scalar_lea.vmem %s3, %s280
        $region32: #{tpu_custom_call.1} parent=19 // pred_fallthru
          _
        // Predicated region
        $region33: #{tpu_custom_call.1} parent=19 // pred_check
          %p282 = pneg %p153
        $region34: #{tpu_custom_call.1} parent=19 // pred_check_branch
          %284 = sbr.rel (%p282) target = $region36
        $region35: #{tpu_custom_call.1} parent=19 // pred_region
          %s285 = sand.u32 %s143, 1
          %s286 = scalar_lea.sflag [#allocation7], %s285
          %s287 = sand.u32 %s143, 1
          %s288 = smul.addr %s287, 64
          %s289 = scalar_lea.vmem [#allocation6], %s288
          %s290 = smul.u32 4, %s28
          %s292 = ssub.s32 1024, 1024
          %293 = vsyncadd %s286, %s292
          %s294 = smul.addr %s290, 6
          %s295 = sadd.s32 %s27, %s294
          %s296 = smul.addr %s295, 128
          %s297 = scalar_lea.hbm %s4, %s296
          %s298 = sshll.u32 %s289, 4
          %s299 = int_to_ptr.vmem [resolvable:$true] %s298
          %304 = dma.hbm_to_vmem [thread:$0]  %s297, 1024, %s299, %s286, 384, 128, 8
        $region36: #{tpu_custom_call.1} parent=19 // pred_fallthru
          _
        // Predicated region
        $region37: #{tpu_custom_call.1} parent=19 // pred_check
          %p305 = pneg %p181
        $region38: #{tpu_custom_call.1} parent=19 // pred_check_branch
          %307 = sbr.rel (%p305) target = $region40
        $region39: #{tpu_custom_call.1} parent=19 // pred_region
          %s308 = sand.u32 %s171, 1
          %s309 = sand.u32 %s171, 1
          %s310 = smul.addr %s309, 32
          %s311 = scalar_lea.vmem [#allocation9], %s310
          %s312 = smul.u32 4, %s28
          %s313 = smul.addr %s312, 3
          %s314 = sadd.s32 %s27, %s313
          %s315 = smul.addr %s314, 8
          %s316 = scalar_lea.vmem %s5, %s315
          // Predicated region
          $region41: #{tpu_custom_call.1} parent=39 // pred_check
            _
          $region42: #{tpu_custom_call.1} parent=39 // pred_check_branch
            %318 = sbr.rel (0) target = $region44
          $region43: #{tpu_custom_call.1} parent=39 // pred_region
            // Predicated region
            $region45: #{tpu_custom_call.1} parent=43 // pred_check
              _
            $region46: #{tpu_custom_call.1} parent=43 // pred_check_branch
              %320 = sbr.rel (0) target = $region48
            $region47: #{tpu_custom_call.1} parent=43 // pred_region
              // Predicated region
              $region60: #{tpu_custom_call.1} parent=47 // pred_check
                _
              $region61: #{tpu_custom_call.1} parent=47 // pred_check_branch
                %341 = sbr.rel (0) target = $region63
              $region62: #{tpu_custom_call.1} parent=47 // pred_region
                loop: start=0, step=1, limit=1
                $region64: #{tpu_custom_call.1} parent=62 // loop_pre_header
                  _
                $region65: #{tpu_custom_call.1} parent=62 // loop_header
                  %s343 = sphi 0, %s347
                  %p344 = scmp.ge.s32.totalorder %s343, 1
                  %s348 = sphi %s316, %s316
                  %s349 = sphi %s311, %s311
                $region66: #{tpu_custom_call.1} parent=62 // loop_header_branch
                  %346 = sbr.rel (%p344) target = $region70
                $region67: #{tpu_custom_call.1} parent=62 // loop_body
                  %v350 = vld [vmem:[%s348] sm:$0xff]
                  %351 = vst [vmem:[%s349] sm:$0xff] %v350
                  %v352 = vld [vmem:[%s348 + $0x18] sm:$0xff]
                  %353 = vst [vmem:[%s349 + $0x8] sm:$0xff] %v352
                  %v354 = vld [vmem:[%s348 + $0x30] sm:$0xff]
                  %355 = vst [vmem:[%s349 + $0x10] sm:$0xff] %v354
                  %v356 = vld [vmem:[%s348 + $0x48] sm:$0xff]
                  %357 = vst [vmem:[%s349 + $0x18] sm:$0xff] %v356
                $region68: #{tpu_custom_call.1} parent=62 // loop_footer
                  %s347 = sadd.s32 1, %s343
                $region69: #{tpu_custom_call.1} parent=62 // loop_footer_branch
                  %342 = sbr.rel target = $region65
                $region70: #{tpu_custom_call.1} parent=62 // loop_exit
                  _
              $region63: #{tpu_custom_call.1} parent=47 // pred_fallthru
                _
              // Predicated region
              $region71: #{tpu_custom_call.1} parent=47 // pred_check
                _
              $region72: #{tpu_custom_call.1} parent=47 // pred_check_branch
                %359 = sbr.rel target = $region74
              $region73: #{tpu_custom_call.1} parent=47 // pred_region
                _
              $region74: #{tpu_custom_call.1} parent=47 // pred_fallthru
                _
            $region48: #{tpu_custom_call.1} parent=43 // pred_fallthru
              _
            // Predicated region
            $region49: #{tpu_custom_call.1} parent=43 // pred_check
              _
            $region50: #{tpu_custom_call.1} parent=43 // pred_check_branch
              %322 = sbr.rel target = $region52
            $region51: #{tpu_custom_call.1} parent=43 // pred_region
              loop: start=0, step=1, limit=1
              $region53: #{tpu_custom_call.1} parent=51 // loop_pre_header
                _
              $region54: #{tpu_custom_call.1} parent=51 // loop_header
                %s325 = sphi 0, %s329
                %p326 = scmp.ge.s32.totalorder %s325, 1
                %s330 = sphi %s316, %s316
                %s331 = sphi %s311, %s311
              $region55: #{tpu_custom_call.1} parent=51 // loop_header_branch
                %328 = sbr.rel (%p326) target = $region59
              $region56: #{tpu_custom_call.1} parent=51 // loop_body
                %v332 = vld [vmem:[%s330] sm:$0xff]
                %333 = vst [vmem:[%s331] sm:$0xff] %v332
                %v334 = vld [vmem:[%s330 + $0x18] sm:$0xff]
                %335 = vst [vmem:[%s331 + $0x8] sm:$0xff] %v334
                %v336 = vld [vmem:[%s330 + $0x30] sm:$0xff]
                %337 = vst [vmem:[%s331 + $0x10] sm:$0xff] %v336
                %v338 = vld [vmem:[%s330 + $0x48] sm:$0xff]
                %339 = vst [vmem:[%s331 + $0x18] sm:$0xff] %v338
              $region57: #{tpu_custom_call.1} parent=51 // loop_footer
                %s329 = sadd.s32 1, %s325
              $region58: #{tpu_custom_call.1} parent=51 // loop_footer_branch
                %324 = sbr.rel target = $region54
              $region59: #{tpu_custom_call.1} parent=51 // loop_exit
                _
            $region52: #{tpu_custom_call.1} parent=43 // pred_fallthru
              _
          $region44: #{tpu_custom_call.1} parent=39 // pred_fallthru
            _
          %360 = vnop
        $region40: #{tpu_custom_call.1} parent=19 // pred_fallthru
          _
      $region20: #{tpu_custom_call.1} parent=5 // pred_fallthru
        _
      %p361 = scmp.le.s32.totalorder 1, %s20
      %p362 = scmp.lt.s32.totalorder %s20, 4
      %p363 = pnand %p361, %p362
      %p364 = pneg %p363
      // Predicated region
      $region75: #{tpu_custom_call.1} parent=5 // pred_check
        _
      $region76: #{tpu_custom_call.1} parent=5 // pred_check_branch
        %366 = sbr.rel (%p363) target = $region78
      $region77: #{tpu_custom_call.1} parent=5 // pred_region
        %s367 = ssub.s32 %s20, 1
        %s368 = sand.u32 %s146, 1
        %s369 = scalar_lea.sflag [#allocation7], %s368
        %s370 = sand.u32 %s146, 1
        %s371 = smul.addr %s370, 64
        %s372 = scalar_lea.vmem [#allocation6], %s371
        // Predicated region
        $region79: #{tpu_custom_call.1} parent=77 // pred_check
          %p373 = pneg %p159
        $region80: #{tpu_custom_call.1} parent=77 // pred_check_branch
          %375 = sbr.rel (%p373) target = $region82
        $region81: #{tpu_custom_call.1} parent=77 // pred_region
          %376 = dma.done %s369, 1024
        $region82: #{tpu_custom_call.1} parent=77 // pred_fallthru
          _
        %s377 = sand.u32 %s174, 1
        %s378 = sand.u32 %s174, 1
        %s379 = smul.addr %s378, 32
        %s380 = scalar_lea.vmem [#allocation9], %s379
        // Predicated region
        $region83: #{tpu_custom_call.1} parent=77 // pred_check
          %p381 = pneg %p187
        $region84: #{tpu_custom_call.1} parent=77 // pred_check_branch
          %383 = sbr.rel (%p381) target = $region86
        $region85: #{tpu_custom_call.1} parent=77 // pred_region
          _
        $region86: #{tpu_custom_call.1} parent=77 // pred_fallthru
          _
        %p384 = scmp.lt.s32.totalorder %s29, 2
        %s385 = scalar_select %p384, %s29, 2
        %s386 = smul.addr %s385, 8
        %s387 = scalar_lea.vmem %s0, %s386
        %p388 = pneg %p58
        %p389 = pneg %p55
        %p390 = pneg %p79
        %p391 = pneg %p76
        %p392 = scmp.lt.s32.totalorder %s29, 2
        %s393 = scalar_select %p392, %s29, 2
        %s394 = smul.addr %s393, 8
        %s395 = scalar_lea.vmem %s2, %s394
        %p396 = pneg %p105
        %p397 = pneg %p102
        %p398 = scmp.lt.s32.totalorder %s29, 2
        %s399 = scalar_select %p398, %s29, 2
        %s400 = smul.addr %s399, 8
        %s401 = scalar_lea.vmem %s3, %s400
        %p402 = pneg %p131
        %p403 = pneg %p128
        %s404 = sand.u32 %s146, 1
        %s405 = scalar_lea.sflag [#allocation7], %s404
        %s406 = sand.u32 %s146, 1
        %s407 = smul.addr %s406, 64
        %s408 = scalar_lea.vmem [#allocation6], %s407
        %p409 = pneg %p159
        %p410 = pneg %p156
        %s411 = sand.u32 %s174, 1
        %s412 = sand.u32 %s174, 1
        %s413 = smul.addr %s412, 32
        %s414 = scalar_lea.vmem [#allocation9], %s413
        %p415 = pneg %p187
        %p416 = pneg %p184
        %p417 = pneg %p213
        %p418 = pneg %p210
        %s419 = sand.u32 %s200, 1
        %s420 = scalar_lea.sflag [#allocation8], %s419
        %s421 = sand.u32 %s200, 1
        %s422 = smul.addr %s421, 8
        %s423 = scalar_lea.vmem [#allocation10], %s422
        %p424 = pneg %p239
        %p425 = pneg %p236
        %p426 = scmp.lt.s32.totalorder %s29, 2
        %s427 = scalar_select %p426, %s29, 2
        %s428 = smul.addr %s427, 8
        %s429 = scalar_lea.vmem %s7, %s428
        %p430 = scmp.lt.s32.totalorder %s29, 2
        %s431 = scalar_select %p430, %s29, 2
        %s432 = smul.addr %s431, 8
        %s433 = scalar_lea.vmem %s0, %s432
        %p434 = scmp.lt.s32.totalorder %s29, 2
        %s435 = scalar_select %p434, %s29, 2
        %s436 = smul.addr %s435, 8
        %s437 = scalar_lea.vmem %s2, %s436
        %p438 = scmp.lt.s32.totalorder %s29, 2
        %s439 = scalar_select %p438, %s29, 2
        %s440 = smul.addr %s439, 8
        %s441 = scalar_lea.vmem %s3, %s440
        %s442 = smul.u32 4, %s30
        %s443 = smul.u32 4, %s30
        %p444 = scmp.lt.s32.totalorder %s29, 2
        %s445 = scalar_select %p444, %s29, 2
        %s446 = smul.addr %s445, 8
        %s447 = scalar_lea.vmem %s7, %s446
        %v448 = vld [vmem:[%s1] sm:$0xff]
        %v449 = vld [vmem:[%s1 + $0x8] sm:$0xff]
        %v450 = vld [vmem:[%s1 + $0x10] sm:$0xff]
        %v451 = vld [vmem:[%s1 + $0x18] sm:$0xff]
        %v452 = vld [vmem:[%s437] sm:$0xff]
        %v453 = vld [vmem:[%s441] sm:$0xff]
        %p454 = scmp.eq.s32.totalorder %s30, 0
        // Predicated region
        $region87: #{tpu_custom_call.1} parent=77 // pred_check
          %p455 = pneg %p454
        $region88: #{tpu_custom_call.1} parent=77 // pred_check_branch
          %457 = sbr.rel (%p455) target = $region90
        $region89: #{tpu_custom_call.1} parent=77 // pred_region
          %v458 = vld [vmem:[%s433] sm:$0xff]
          %vm459 = vcmask 261120
          %v461 = vsel %vm459, %v458, 0
          %463 = vmatprep.subr.mxu0 0.0
          %464 = vmatpush1.msra.mxu0 %v448
          %465 = vmatprep.subr.mxu0 0.0
          %466 = vmatpush1.msra.mxu0 %v449
          %467 = vmatprep.subr.mxu0 0.0
          %468 = vmatpush1.msra.mxu0 %v450
          %469 = vmatprep.subr.mxu0 0.0
          %470 = vmatpush1.msra.mxu0 %v451
          %471 = vmatprep.subr.mxu0 0.0
          %472 = vmatpush1.msra.mxu0 0.0
          %473 = vmatprep.subr.mxu0 0.0
          %474 = vmatpush1.msra.mxu0 0.0
          %475 = vmatprep.subr.mxu0 0.0
          %476 = vmatpush1.msra.mxu0 0.0
          %477 = vmatprep.subr.mxu0 0.0
          %478 = vmatpush1.msra.mxu0 0.0
          %479 = vmatprep.subr.mxu0 0.0
          %480 = vmatpush1.msra.mxu0 0.0
          %481 = vmatprep.subr.mxu0 0.0
          %482 = vmatpush1.msra.mxu0 0.0
          %483 = vmatprep.subr.mxu0 0.0
          %484 = vmatpush1.msra.mxu0 0.0
          %485 = vmatprep.subr.mxu0 0.0
          %486 = vmatpush1.msra.mxu0 0.0
          %487 = vmatprep.subr.mxu0 0.0
          %488 = vmatpush1.msra.mxu0 0.0
          %489 = vmatprep.subr.mxu0 0.0
          %490 = vmatpush1.msra.mxu0 0.0
          %491 = vmatprep.subr.mxu0 0.0
          %492 = vmatpush1.msra.mxu0 0.0
          %493 = vmatprep.subr.mxu0 0.0
          %494 = vmatpush1.msra.mxu0 0.0
          %495 = vmatprep.subr.mxu0 0.0
          %496 = vmatpush1.msra.mxu0 0.0
          %497 = vmatprep.subr.mxu0 0.0
          %498 = vmatpush1.msra.mxu0 0.0
          %499 = vmatprep.subr.mxu0 0.0
          %500 = vmatpush1.msra.mxu0 0.0
          %501 = vmatprep.subr.mxu0 0.0
          %502 = vmatpush1.msra.mxu0 0.0
          %503 = vmatprep.subr.mxu0 0.0
          %504 = vmatpush1.msra.mxu0 0.0
          %505 = vmatprep.subr.mxu0 0.0
          %506 = vmatpush1.msra.mxu0 0.0
          %507 = vmatprep.subr.mxu0 0.0
          %508 = vmatpush1.msra.mxu0 0.0
          %509 = vmatprep.subr.mxu0 0.0
          %510 = vmatpush1.msra.mxu0 0.0
          %511 = vmatprep.subr.mxu0 0.0
          %512 = vmatpush1.msra.mxu0 0.0
          %513 = vmatprep.subr.mxu0 0.0
          %514 = vmatpush1.msra.mxu0 0.0
          %515 = vmatprep.subr.mxu0 0.0
          %516 = vmatpush1.msra.mxu0 0.0
          %517 = vmatprep.subr.mxu0 0.0
          %518 = vmatpush1.msra.mxu0 0.0
          %519 = vmatprep.subr.mxu0 0.0
          %520 = vmatpush1.msra.mxu0 0.0
          %521 = vmatprep.subr.mxu0 0.0
          %522 = vmatpush1.msra.mxu0 0.0
          %523 = vmatprep.subr.mxu0 0.0
          %524 = vmatpush1.msra.mxu0 0.0
          %525 = vmatprep.subr.mxu0 0.0
          %526 = vmatpush1.msra.mxu0 0.0
          %527 = vmatprep.mubr.f32.mxu0 0.0
          %528 = vmatmul.mubr.f32.gmra.mrb[0].mxu0 %v461
          %v529 = vpop.f32.mrb[0].mxu0
          %v530 = vadd.f32 0.0, %v529
          %v531 = vpop.f32.mrb[0].mxu0
          %532 = vdwg.mxu0
          %v533 = vsub.f32 %v530, %v452
          %v534 = vsub.f32 %v533, %v452
          %v535 = vmul.f32 %v458, %v534
          %v536 = vsel %vm459, %v535, 0.0
          %537 = vadd.xlane.f32.xlu0 %v536
          %v538 = vpop.xlane.xlu0 %537
          %v539 = vmul.f32 %v538, 0.5
          %v540 = vadd.f32 %v539, %v453
          %541 = vst.msk [vmem:[#allocation2] sm:$0xff] %vm459, %v458
          %542 = vst.msk [vmem:[#allocation3] sm:$0xff] %vm459, %v533
          %vm543 = vcmask 7168
          %544 = vst.msk [vmem:[#allocation4] sm:$0xff] %vm543, %v540
          %545 = vst.msk [vmem:[#allocation5] sm:$0xff] %vm543, %v540
        $region90: #{tpu_custom_call.1} parent=77 // pred_fallthru
          _
        %v546 = vld [vmem:[#allocation2] sm:$0xff]
        %v547 = vld [vmem:[#allocation3] sm:$0xff]
        %v548 = vld [vmem:[#allocation4] sm:$0xff]
        loop: start=0, step=1, limit=4
        $region91: #{tpu_custom_call.1} parent=77 // loop_pre_header
          _
        $region92: #{tpu_custom_call.1} parent=77 // loop_header
          %s550 = sphi 0, %s554
          %p551 = scmp.ge.s32.totalorder %s550, 4
          %v555 = vphi %v546, %v762
          %v556 = vphi %v547, %v763
          %v557 = vphi %v548, %v764
        $region93: #{tpu_custom_call.1} parent=77 // loop_header_branch
          %553 = sbr.rel (%p551) target = $region97
        $region94: #{tpu_custom_call.1} parent=77 // loop_body
          %s558 = smul.u32 %s550, 16
          %s559 = scalar_lea.vmem %s372, %s558 [#allocation6]
          %v560 = vld [vmem:[%s559] sm:$0xff]
          %v561 = vmul.f32 %v556, 0.001
          %v562 = vsub.f32 %v555, %v561
          %v563 = vmul.f32 %v560, 0.04472136
          %v564 = vadd.f32 %v562, %v563
          %vm565 = vcmask 261120
          %v567 = vsel %vm565, %v564, 0
          %569 = vmatprep.subr.mxu0 0.0
          %570 = vmatpush1.msra.mxu0 %v448
          %571 = vmatprep.subr.mxu0 0.0
          %572 = vmatpush1.msra.mxu0 %v449
          %573 = vmatprep.subr.mxu0 0.0
          %574 = vmatpush1.msra.mxu0 %v450
          %575 = vmatprep.subr.mxu0 0.0
          %576 = vmatpush1.msra.mxu0 %v451
          %577 = vmatprep.subr.mxu0 0.0
          %578 = vmatpush1.msra.mxu0 0.0
          %579 = vmatprep.subr.mxu0 0.0
          %580 = vmatpush1.msra.mxu0 0.0
          %581 = vmatprep.subr.mxu0 0.0
          %582 = vmatpush1.msra.mxu0 0.0
          %583 = vmatprep.subr.mxu0 0.0
          %584 = vmatpush1.msra.mxu0 0.0
          %585 = vmatprep.subr.mxu0 0.0
          %586 = vmatpush1.msra.mxu0 0.0
          %587 = vmatprep.subr.mxu0 0.0
          %588 = vmatpush1.msra.mxu0 0.0
          %589 = vmatprep.subr.mxu0 0.0
          %590 = vmatpush1.msra.mxu0 0.0
          %591 = vmatprep.subr.mxu0 0.0
          %592 = vmatpush1.msra.mxu0 0.0
          %593 = vmatprep.subr.mxu0 0.0
          %594 = vmatpush1.msra.mxu0 0.0
          %595 = vmatprep.subr.mxu0 0.0
          %596 = vmatpush1.msra.mxu0 0.0
          %597 = vmatprep.subr.mxu0 0.0
          %598 = vmatpush1.msra.mxu0 0.0
          %599 = vmatprep.subr.mxu0 0.0
          %600 = vmatpush1.msra.mxu0 0.0
          %601 = vmatprep.subr.mxu0 0.0
          %602 = vmatpush1.msra.mxu0 0.0
          %603 = vmatprep.subr.mxu0 0.0
          %604 = vmatpush1.msra.mxu0 0.0
          %605 = vmatprep.subr.mxu0 0.0
          %606 = vmatpush1.msra.mxu0 0.0
          %607 = vmatprep.subr.mxu0 0.0
          %608 = vmatpush1.msra.mxu0 0.0
          %609 = vmatprep.subr.mxu0 0.0
          %610 = vmatpush1.msra.mxu0 0.0
          %611 = vmatprep.subr.mxu0 0.0
          %612 = vmatpush1.msra.mxu0 0.0
          %613 = vmatprep.subr.mxu0 0.0
          %614 = vmatpush1.msra.mxu0 0.0
          %615 = vmatprep.subr.mxu0 0.0
          %616 = vmatpush1.msra.mxu0 0.0
          %617 = vmatprep.subr.mxu0 0.0
          %618 = vmatpush1.msra.mxu0 0.0
          %619 = vmatprep.subr.mxu0 0.0
          %620 = vmatpush1.msra.mxu0 0.0
          %621 = vmatprep.subr.mxu0 0.0
          %622 = vmatpush1.msra.mxu0 0.0
          %623 = vmatprep.subr.mxu0 0.0
          %624 = vmatpush1.msra.mxu0 0.0
          %625 = vmatprep.subr.mxu0 0.0
          %626 = vmatpush1.msra.mxu0 0.0
          %627 = vmatprep.subr.mxu0 0.0
          %628 = vmatpush1.msra.mxu0 0.0
          %629 = vmatprep.subr.mxu0 0.0
          %630 = vmatpush1.msra.mxu0 0.0
          %631 = vmatprep.subr.mxu0 0.0
          %632 = vmatpush1.msra.mxu0 0.0
          %633 = vmatprep.mubr.f32.mxu0 0.0
          %634 = vmatmul.mubr.f32.gmra.mrb[0].mxu0 %v567
          %v635 = vpop.f32.mrb[0].mxu0
          %v636 = vadd.f32 0.0, %v635
          %v637 = vpop.f32.mrb[0].mxu0
          %638 = vdwg.mxu0
          %v639 = vsub.f32 %v636, %v452
          %v640 = vsub.f32 %v555, %v564
          %v641 = vmul.f32 %v639, 0.001
          %v642 = vadd.f32 %v640, %v641
          %v643 = vmul.f32 %v642, 22.36068
          %v644 = vmul.f32 %v560, %v560
          %v645 = vmul.f32 %v643, %v643
          %v646 = vsub.f32 %v644, %v645
          %v647 = vsel %vm565, %v646, 0.0
          %648 = vadd.xlane.f32.xlu0 %v647
          %v649 = vpop.xlane.xlu0 %648
          %v650 = vmul.f32 %v649, 0.5
          %v651 = vadd.f32 %v650, 0.0
          %s652 = sadd.s32 8, %s558
          %s653 = scalar_lea.vmem %s372, %s652 [#allocation6]
          %v654 = vld [vmem:[%s653] sm:$0xff]
          %v655 = vsub.f32 %v564, %v641
          %v656 = vmul.f32 %v654, 0.04472136
          %v657 = vadd.f32 %v655, %v656
          %v659 = vsel %vm565, %v657, 0
          %661 = vmatprep.subr.mxu0 0.0
          %662 = vmatpush1.msra.mxu0 %v448
          %663 = vmatprep.subr.mxu0 0.0
          %664 = vmatpush1.msra.mxu0 %v449
          %665 = vmatprep.subr.mxu0 0.0
          %666 = vmatpush1.msra.mxu0 %v450
          %667 = vmatprep.subr.mxu0 0.0
          %668 = vmatpush1.msra.mxu0 %v451
          %669 = vmatprep.subr.mxu0 0.0
          %670 = vmatpush1.msra.mxu0 0.0
          %671 = vmatprep.subr.mxu0 0.0
          %672 = vmatpush1.msra.mxu0 0.0
          %673 = vmatprep.subr.mxu0 0.0
          %674 = vmatpush1.msra.mxu0 0.0
          %675 = vmatprep.subr.mxu0 0.0
          %676 = vmatpush1.msra.mxu0 0.0
          %677 = vmatprep.subr.mxu0 0.0
          %678 = vmatpush1.msra.mxu0 0.0
          %679 = vmatprep.subr.mxu0 0.0
          %680 = vmatpush1.msra.mxu0 0.0
          %681 = vmatprep.subr.mxu0 0.0
          %682 = vmatpush1.msra.mxu0 0.0
          %683 = vmatprep.subr.mxu0 0.0
          %684 = vmatpush1.msra.mxu0 0.0
          %685 = vmatprep.subr.mxu0 0.0
          %686 = vmatpush1.msra.mxu0 0.0
          %687 = vmatprep.subr.mxu0 0.0
          %688 = vmatpush1.msra.mxu0 0.0
          %689 = vmatprep.subr.mxu0 0.0
          %690 = vmatpush1.msra.mxu0 0.0
          %691 = vmatprep.subr.mxu0 0.0
          %692 = vmatpush1.msra.mxu0 0.0
          %693 = vmatprep.subr.mxu0 0.0
          %694 = vmatpush1.msra.mxu0 0.0
          %695 = vmatprep.subr.mxu0 0.0
          %696 = vmatpush1.msra.mxu0 0.0
          %697 = vmatprep.subr.mxu0 0.0
          %698 = vmatpush1.msra.mxu0 0.0
          %699 = vmatprep.subr.mxu0 0.0
          %700 = vmatpush1.msra.mxu0 0.0
          %701 = vmatprep.subr.mxu0 0.0
          %702 = vmatpush1.msra.mxu0 0.0
          %703 = vmatprep.subr.mxu0 0.0
          %704 = vmatpush1.msra.mxu0 0.0
          %705 = vmatprep.subr.mxu0 0.0
          %706 = vmatpush1.msra.mxu0 0.0
          %707 = vmatprep.subr.mxu0 0.0
          %708 = vmatpush1.msra.mxu0 0.0
          %709 = vmatprep.subr.mxu0 0.0
          %710 = vmatpush1.msra.mxu0 0.0
          %711 = vmatprep.subr.mxu0 0.0
          %712 = vmatpush1.msra.mxu0 0.0
          %713 = vmatprep.subr.mxu0 0.0
          %714 = vmatpush1.msra.mxu0 0.0
          %715 = vmatprep.subr.mxu0 0.0
          %716 = vmatpush1.msra.mxu0 0.0
          %717 = vmatprep.subr.mxu0 0.0
          %718 = vmatpush1.msra.mxu0 0.0
          %719 = vmatprep.subr.mxu0 0.0
          %720 = vmatpush1.msra.mxu0 0.0
          %721 = vmatprep.subr.mxu0 0.0
          %722 = vmatpush1.msra.mxu0 0.0
          %723 = vmatprep.subr.mxu0 0.0
          %724 = vmatpush1.msra.mxu0 0.0
          %725 = vmatprep.mubr.f32.mxu0 0.0
          %726 = vmatmul.mubr.f32.gmra.mrb[0].mxu0 %v659
          %v727 = vpop.f32.mrb[0].mxu0
          %v728 = vadd.f32 0.0, %v727
          %v729 = vpop.f32.mrb[0].mxu0
          %730 = vdwg.mxu0
          %v731 = vsub.f32 %v728, %v452
          %v732 = vsub.f32 %v731, %v452
          %v733 = vmul.f32 %v657, %v732
          %v734 = vsel %vm565, %v733, 0.0
          %735 = vadd.xlane.f32.xlu0 %v734
          %v736 = vpop.xlane.xlu0 %735
          %v737 = vmul.f32 %v736, 0.5
          %v738 = vadd.f32 %v737, %v453
          %v739 = vsub.f32 %v564, %v657
          %v740 = vmul.f32 %v731, 0.001
          %v741 = vadd.f32 %v739, %v740
          %v742 = vmul.f32 %v741, 22.36068
          %v743 = vmul.f32 %v654, %v654
          %v744 = vmul.f32 %v742, %v742
          %v745 = vsub.f32 %v743, %v744
          %v746 = vsel %vm565, %v745, 0.0
          %747 = vadd.xlane.f32.xlu0 %v746
          %v748 = vpop.xlane.xlu0 %747
          %v749 = vmul.f32 %v748, 0.5
          %v750 = vadd.f32 %v651, %v749
          %s751 = smul.u32 %s550, 8
          %s752 = scalar_lea.vmem %s380, %s751 [#allocation9]
          %v753 = vld [vmem:[%s752] sm:$0xff]
          %v754 = vsub.f32 %v557, %v738
          %v755 = vadd.f32 %v754, %v750
          %vm756 = vcmp.lt.f32.partialorder %v753, %v755
          %v757 = vsel %vm756, 1, 0
          %758 = vset.pattern.permute.xlu0 0
          %759 = vperm.xlu0 %758, %v757
          %v760 = vpop.permute.xlu0 %759
          %vm761 = vcmp.eq.s32.totalorder %v760, 1
          %v762 = vsel %vm761, %v657, %v555
          %v763 = vsel %vm761, %v731, %v556
          %v764 = vsel %vm756, %v738, %v557
        $region95: #{tpu_custom_call.1} parent=77 // loop_footer
          %s554 = sadd.s32 1, %s550
        $region96: #{tpu_custom_call.1} parent=77 // loop_footer_branch
          %549 = sbr.rel target = $region92
        $region97: #{tpu_custom_call.1} parent=77 // loop_exit
          _
        %vm765 = vcmask 261120
        %766 = vst.msk [vmem:[#allocation2] sm:$0xff] %vm765, %v555
        %767 = vst.msk [vmem:[#allocation3] sm:$0xff] %vm765, %v556
        %vm768 = vcmask 7168
        %769 = vst.msk [vmem:[#allocation4] sm:$0xff] %vm768, %v557
        // Predicated region
        $region98: #{tpu_custom_call.1} parent=77 // pred_check
          %p770 = pneg %p454
        $region99: #{tpu_custom_call.1} parent=77 // pred_check_branch
          %772 = sbr.rel (%p770) target = $region101
        $region100: #{tpu_custom_call.1} parent=77 // pred_region
          %773 = vst.msk [vmem:[%s423] sm:$0xff] %vm765, %v555
          %v774 = vld [vmem:[#allocation5] sm:$0xff]
          %v775 = vsub.f32 %v557, %v774
          %776 = vst.msk [vmem:[%s447] sm:$0xff] %vm768, %v775
        $region101: #{tpu_custom_call.1} parent=77 // pred_fallthru
          _
        %s777 = sand.u32 %s200, 1
        %s778 = scalar_lea.sflag [#allocation8], %s777
        %s779 = sand.u32 %s200, 1
        %s780 = smul.addr %s779, 8
        %s781 = scalar_lea.vmem [#allocation10], %s780
        %p782 = scmp.lt.s32.totalorder %s29, 2
        %s783 = scalar_select %p782, %s29, 2
        %s784 = smul.addr %s783, 8
        %s785 = scalar_lea.vmem %s7, %s784
        // Predicated region
        $region102: #{tpu_custom_call.1} parent=77 // pred_check
          %p786 = pneg %p210
        $region103: #{tpu_custom_call.1} parent=77 // pred_check_branch
          %788 = sbr.rel (%p786) target = $region105
        $region104: #{tpu_custom_call.1} parent=77 // pred_region
          %s790 = ssub.s32 128, 128
          %791 = vsyncadd %s778, %s790
          %s792 = smul.addr %s29, 128
          %s793 = scalar_lea.hbm %s6, %s792
          %s795 = sshll.u32 %s781, 4
          %s796 = int_to_ptr.vmem [resolvable:$true] %s795
          %798 = dma.vmem_to_hbm [thread:$0]  %s796, 128, %s793, %s778
        $region105: #{tpu_custom_call.1} parent=77 // pred_fallthru
          _
        // Predicated region
        $region106: #{tpu_custom_call.1} parent=77 // pred_check
          %p799 = pneg %p236
        $region107: #{tpu_custom_call.1} parent=77 // pred_check_branch
          %801 = sbr.rel (%p799) target = $region109
        $region108: #{tpu_custom_call.1} parent=77 // pred_region
          _
        $region109: #{tpu_custom_call.1} parent=77 // pred_fallthru
          _
      $region78: #{tpu_custom_call.1} parent=5 // pred_fallthru
        _
      %p802 = scmp.le.s32.totalorder 2, %s20
      // Predicated region
      $region110: #{tpu_custom_call.1} parent=5 // pred_check
        %p803 = pneg %p802
      $region111: #{tpu_custom_call.1} parent=5 // pred_check_branch
        %805 = sbr.rel (%p803) target = $region113
      $region112: #{tpu_custom_call.1} parent=5 // pred_region
        %s806 = ssub.s32 %s20, 2
        // Predicated region
        $region114: #{tpu_custom_call.1} parent=112 // pred_check
          %p807 = pneg %p216
        $region115: #{tpu_custom_call.1} parent=112 // pred_check_branch
          %809 = sbr.rel (%p807) target = $region117
        $region116: #{tpu_custom_call.1} parent=112 // pred_region
          %s810 = sand.u32 %s201, 1
          %s811 = scalar_lea.sflag [#allocation8], %s810
          %s812 = sand.u32 %s201, 1
          %s813 = smul.addr %s812, 8
          %s814 = scalar_lea.vmem [#allocation10], %s813
          %815 = dma.done %s811, 128
        $region117: #{tpu_custom_call.1} parent=112 // pred_fallthru
          _
        // Predicated region
        $region118: #{tpu_custom_call.1} parent=112 // pred_check
          %p816 = pneg %p242
        $region119: #{tpu_custom_call.1} parent=112 // pred_check_branch
          %818 = sbr.rel (%p816) target = $region121
        $region120: #{tpu_custom_call.1} parent=112 // pred_region
          %p819 = scmp.lt.s32.totalorder %s31, 2
          %s820 = scalar_select %p819, %s31, 2
          %s821 = smul.addr %s820, 8
          %s822 = scalar_lea.vmem %s7, %s821
        $region121: #{tpu_custom_call.1} parent=112 // pred_fallthru
          _
      $region113: #{tpu_custom_call.1} parent=5 // pred_fallthru
        _
    $region6: #{tpu_custom_call.1} parent=1 // loop_footer
      %s24 = sadd.s32 1, %s20
    $region7: #{tpu_custom_call.1} parent=1 // loop_footer_branch
      %19 = sbr.rel target = $region3
    $region8: #{tpu_custom_call.1} parent=1 // loop_exit
      _
    %823 = vsyncpa [#allocation7], 1
    %s824 = scalar_lea.sflag [#allocation7], 1
    %825 = vsyncpa %s824, 1
    %826 = vsyncpa [#allocation8], 1
    %s827 = scalar_lea.sflag [#allocation8], 1
    %828 = vsyncpa %s827, 1

</llo_original>
